<compile_context>
chip_gen: v6e
topology: v6e:2x2x1
jax: 0.10.0
libtpu: 0.0.40
codegen_flags: <defaults>
</compile_context>

<pallas_src>
import functools

import numpy as np
import jax
import jax.numpy as jnp
from jax.experimental import pallas as pl
from jax.experimental.pallas import tpu as pltpu


def _round_up(x, m):
    return ((x + m - 1) // m) * m


def _device_kind():
    try:
        return jax.devices()[0].device_kind.lower()
    except Exception:
        return ""


def _elementwise_dtype():
    # bf16 VALU/EUP only on v6e / v7x; v5e (and older) would decompose bf16
    # elementwise math, so keep it in f32 there.
    kind = _device_kind()
    return "bfloat16" if ("v6" in kind or "v7" in kind) else "float32"


def _vmem_limit_bytes(tile_m, Np, Fp):
    # Double-buffered pipelined slabs (bf16 edges) + resident inputs + per-tile
    # f32 blocks, with a little headroom; clamp to a per-device safe cap.
    edge = 3 * (tile_m * Np * 2) * 2                    # relx/rely/mask, 2 bufs
    resident = (Np * Fp * 2) * 2 + (Np * 4) * 2 + (2 * Fp * 4) * 2
    per_tile = (tile_m * Fp * 4 * 2 + tile_m * 4 + tile_m * Fp * 4) * 2
    need = edge + resident + per_tile + (4 << 20)
    cap = (48 << 20) if "v7" in _device_kind() else (96 << 20)   # v7x: 64 MiB VMEM
    return int(min(cap, max(32 << 20, need)))


# ---------------------------------------------------------------------------
# Pallas kernel: one (tile_m, Np) slab of destination nodes for one layer
# ---------------------------------------------------------------------------
def _graph_attention_kernel(relx_ref, rely_ref, mask_ref,
                            xsrc_ref, xdst_ref, sdst_ref, ssrc_ref,
                            werel_ref, warel_ref, out_ref, *, compute_dtype):
    cdt = compute_dtype
    relx = relx_ref[...]                       # (tm, Np) bf16 edge streams
    rely = rely_ref[...]
    mask = mask_ref[...]                       # (tm, Np) bf16 {0,1}

    # ---- edge attention logits: logit[j,i] = w_att . [feat_i, rel_ij, feat_j]
    # dominant (tm, Np) elementwise chain in `cdt` (bf16 on v6e/v7x, f32 on v5e)
    wrx = warel_ref[0, 0].astype(cdt)          # SMEM scalars (w_att rel part)
    wry = warel_ref[0, 1].astype(cdt)
    logits = (relx.astype(cdt) * wrx + rely.astype(cdt) * wry
              + sdst_ref[...].astype(cdt) + ssrc_ref[...].astype(cdt))
    logits = jnp.maximum(logits, 0.2 * logits)                  # LeakyReLU(0.2)

    # ---- masked softmax over src nodes (normalization deferred)
    # -1e30 sentinel is representable in bf16; exp/denom/accumulation in f32.
    masked = jnp.where(mask > 0, logits, -1e30)
    m = jnp.max(masked, axis=-1, keepdims=True)                 # (tm, 1)
    maskf = mask.astype(jnp.float32)
    e = jnp.exp((masked - m).astype(jnp.float32)) * maskf       # exactly 0 on non-edges
    denom = jnp.sum(e, axis=-1, keepdims=True)                  # >= 1 if any edge, else 0
    # NOTE: nn.Dropout on the attention weights is identity in eval mode.

    # ---- weighted aggregation with the edge embedding decomposed:
    # out[j] = sum_i attn[j,i] * (x_src[i] + rel_ij @ We_rel) + 1{edge}(j) * x_dst[j]
    agg = jnp.dot(e.astype(jnp.bfloat16), xsrc_ref[...],        # bf16 MXU, f32 acc
                  preferred_element_type=jnp.float32)           # (tm, Fp)
    rx = jnp.sum(e * relx, axis=-1, keepdims=True)              # f32 (bf16 promoted)
    ry = jnp.sum(e * rely, axis=-1, keepdims=True)
    rel_term = rx * werel_ref[0:1, :] + ry * werel_ref[1:2, :]  # (tm, Fp)

    # deferred normalization (EUP reciprocal); sum(attn) == has_edge indicator
    inv = pl.reciprocal(jnp.maximum(denom, 1.0), approx=True)
    has_edge = (denom > 0).astype(jnp.float32)
    out = (agg + rel_term) * inv + has_edge * xdst_ref[...]
    out_ref[...] = jnp.maximum(out, 0.0)                        # ReLU


@functools.partial(jax.jit,
                   static_argnames=("tile_m", "compute_dtype", "vmem_limit"))
def graph_attention_layer(feat, relx_T, rely_T, mask_T,
                          w_fused, wa_rel, we_rel, *,
                          tile_m, compute_dtype, vmem_limit):
    """One GraphAttention layer. feat: (Np, Fp) f32, padded & lane-dense."""
    Np, Fp = feat.shape

    # Fused projection: ONE bf16 MXU pass producing [x_src | x_dst | scalars...].
    # w_fused width is 2*Fp + 128 (lane-dense) -> unmasked full-lane stores.
    proj = jnp.dot(feat.astype(jnp.bfloat16), w_fused,
                   preferred_element_type=jnp.float32)          # (Np, 2Fp+128)
    x_src = proj[:, :Fp].astype(jnp.bfloat16)                   # (Np, Fp)  bf16
    x_dst = proj[:, Fp:2 * Fp]                                  # (Np, Fp)  f32
    s_dst = proj[:, 2 * Fp:2 * Fp + 1]                          # (Np, 1)
    s_src = jnp.transpose(proj[:, 2 * Fp + 1:2 * Fp + 2])       # (1, Np) cheap relayout

    grid = (Np // tile_m,)
    edge_spec = pl.BlockSpec((tile_m, Np), lambda i: (i, 0))
    kernel = functools.partial(_graph_attention_kernel,
                               compute_dtype=jnp.dtype(compute_dtype))
    return pl.pallas_call(
        kernel,
        out_shape=jax.ShapeDtypeStruct((Np, Fp), jnp.float32),
        grid=grid,
        in_specs=[
            edge_spec,                                          # relx_T (bf16)
            edge_spec,                                          # rely_T (bf16)
            edge_spec,                                          # mask_T (bf16)
            pl.BlockSpec((Np, Fp), lambda i: (0, 0)),           # x_src (resident)
            pl.BlockSpec((tile_m, Fp), lambda i: (i, 0)),       # x_dst
            pl.BlockSpec((tile_m, 1), lambda i: (i, 0)),        # s_dst
            pl.BlockSpec((1, Np), lambda i: (0, 0)),            # s_src
            pl.BlockSpec((2, Fp), lambda i: (0, 0)),            # we_rel
            pl.BlockSpec(memory_space=pltpu.MemorySpace.SMEM),  # wa_rel scalars
        ],
        out_specs=pl.BlockSpec((tile_m, Fp), lambda i: (i, 0)),
        compiler_params=pltpu.CompilerParams(
            dimension_semantics=("parallel",),
            vmem_limit_bytes=vmem_limit),
        cost_estimate=pl.CostEstimate(
            flops=int(2 * Np * Np * Fp + 14 * Np * Np),
            transcendentals=int(Np * Np),
            bytes_accessed=int(6 * Np * Np + 12 * Np * Fp)),
    )(relx_T, rely_T, mask_T, x_src, x_dst, s_dst, s_src, we_rel, wa_rel)


# ---------------------------------------------------------------------------
# Glue: edge construction (Actor2ActorAttention.edge) in plain JAX
# ---------------------------------------------------------------------------
# TODO(synk): the dynamic-shape edge list (nonzero/topk gather) has no clean
# static-shape Pallas equivalent; we keep the dense mask instead (same math).
def compute_edges(src_pos, dst_pos, rotate, agent_dist, nearest_number):
    rel_pos = src_pos[:, None, :] - dst_pos[None, :, :]          # (Ns, Nd, 2)
    dist = jnp.linalg.norm(rel_pos, axis=-1)                     # (Ns, Nd)
    ns = dist.shape[0]
    k = min(ns, nearest_number)
    nearest = -jax.lax.top_k((-dist).T, k)[0]                    # (Nd, k) ascending
    kth = nearest[:, -1]                                         # (Nd,)
    threshold = jnp.minimum(kth, agent_dist)[None, :]            # (1, Nd)
    mask = dist <= threshold                                     # (Ns, Nd)
    rel_rot = jnp.einsum('ija,jab->ijb', rel_pos, rotate)        # (Ns, Nd, 2)
    return mask, rel_rot


class Actor2ActorAttentionPallas:
    def __init__(self, actor_feature_len, num_attention_layers, cfg, key):
        self.agent_dist = float(cfg['agent_dist'])
        self.nearest_number = int(cfg['nearest_number'])
        F = actor_feature_len
        Fp = _round_up(F, 128)               # lane-dense feature width
        self.F, self.Fp = F, Fp
        ein = 2 * F + 2                      # [src_feat(F), rel(2), dst_feat(F)]
        bound = 1.0 / np.sqrt(ein)           # nn.Linear default init range
        self.ref_layers = []                 # raw params for the NumPy reference
        self.packed_layers = []              # padded / fused device params

        def pad(w, r, c):
            return jnp.zeros((r, c), jnp.float32).at[:w.shape[0], :w.shape[1]].set(w)

        for _ in range(num_attention_layers):
            key, k1, k2 = jax.random.split(key, 3)
            w_att = jax.random.uniform(k1, (ein,), jnp.float32, -bound, bound)
            w_emb = jax.random.uniform(k2, (F, ein), jnp.float32, -bound, bound)
            w_emb_t = w_emb.T                # (ein, F): y = x @ W.T
            wa_src, wa_rel, wa_dst = w_att[:F], w_att[F:F + 2], w_att[F + 2:]
            we_src, we_rel, we_dst = w_emb_t[:F], w_emb_t[F:F + 2], w_emb_t[F + 2:]
            self.ref_layers.append((wa_src.reshape(1, F), wa_rel.reshape(1, 2),
                                    wa_dst.reshape(F, 1), we_src, we_rel, we_dst))
            # fused projection weight [we_src | we_dst | (wa_dst, wa_src, 0...)]
            # total width 2*Fp + 128: lane-dense multiple of 128.
            scal = jnp.concatenate([wa_dst.reshape(F, 1), wa_src.reshape(F, 1)],
                                   axis=1)                        # (F, 2)
            w_fused = jnp.concatenate(
                [pad(we_src, Fp, Fp), pad(we_dst, Fp, Fp), pad(scal, Fp, 128)],
                axis=1).astype(jnp.bfloat16)                      # (Fp, 2Fp+128)
            self.packed_layers.append((w_fused,
                                       wa_rel.reshape(1, 2).astype(jnp.float32),
                                       pad(we_rel, 2, Fp)))

    def __call__(self, actor_features, src_centers, dst_centers, rotate,
                 rel_relation=None, *, tile_m=128):
        if rel_relation is None:
            mask, rel_rot = compute_edges(src_centers, dst_centers, rotate,
                                          self.agent_dist, self.nearest_number)
        else:
            mask, rel_rot = rel_relation
        N = actor_features.shape[0]
        F, Fp = self.F, self.Fp
        Np = _round_up(N, 128)               # lane-dense src axis
        # tile_m=128 fills the MXU M dimension and amortizes per-step overhead,
        # but keep >= 2 grid steps so megacore (v7x, 2 TCs) can shard them.
        tile_m = min(tile_m, max(Np // 2, 8))
        while Np % tile_m:
            tile_m -= 8
        assert tile_m % 8 == 0 and Np % tile_m == 0
        # dense [dst, src] edge tensors in bf16 (halved HBM / VMEM traffic);
        # padded entries carry mask=0 AND rel=0.
        mask_T = jnp.zeros((Np, Np), jnp.bfloat16).at[:N, :N].set(
            mask.T.astype(jnp.bfloat16))
        relx_T = jnp.zeros((Np, Np), jnp.bfloat16).at[:N, :N].set(
            rel_rot[..., 0].T.astype(jnp.bfloat16))
        rely_T = jnp.zeros((Np, Np), jnp.bfloat16).at[:N, :N].set(
            rel_rot[..., 1].T.astype(jnp.bfloat16))
        feat = jnp.zeros((Np, Fp), jnp.float32).at[:N, :F].set(actor_features)

        compute_dtype = _elementwise_dtype()
        vmem_limit = _vmem_limit_bytes(tile_m, Np, Fp)
        # TODO(synk): fusing all layers into a single pallas_call (weights stacked,
        # loop over layers in-kernel) conflicts with tiling over dst rows, since
        # layer l+1 needs layer-l features of ALL src nodes; kept one call/layer.
        # TODO(synk): for very large graphs add a second ("arbitrary") grid axis
        # over the src dimension with an online (flash-style) masked softmax and
        # scalar-prefetched per-block edge-occupancy skipping; at typical actor
        # counts one (tile_m, Np) slab fits easily and the extra machinery is
        # not warranted at these shapes.
        for (w_fused, wa_rel, we_rel) in self.packed_layers:
            feat = graph_attention_layer(feat, relx_T, rely_T, mask_T,
                                         w_fused, wa_rel, we_rel,
                                         tile_m=tile_m,
                                         compute_dtype=compute_dtype,
                                         vmem_limit=vmem_limit)
        return feat[:N, :F], (mask, rel_rot)


# ---------------------------------------------------------------------------
# NumPy reference: exact edge-list semantics of the PyTorch module (eval mode)
# ---------------------------------------------------------------------------
def reference_forward(feat, src_pos, dst_pos, rotate, layers,
                      agent_dist, nearest_number):
    feat = np.asarray(feat, np.float32)
    src = np.asarray(src_pos, np.float32)
    dst = np.asarray(dst_pos, np.float32)
    R = np.asarray(rotate, np.float32)
    rel = src[:, None] - dst[None]
    dist = np.linalg.norm(rel, axis=-1)
    k = min(dist.shape[0], nearest_number)
    kth = np.sort(dist, axis=0)[:k][-1]
    thr = np.minimum(kth, agent_dist)[None]
    mask = dist <= thr
    rel_rot = np.einsum('ija,jab->ijb', rel, R)
    src_idx, dst_idx = np.nonzero(mask)
    edge_rel = rel_rot[mask]
    Nd = dst.shape[0]
    for (wa_src, wa_rel, wa_dst, we_src, we_rel, we_dst) in layers:
        wa_src = np.asarray(wa_src); wa_rel = np.asarray(wa_rel)
        wa_dst = np.asarray(wa_dst)
        W = np.concatenate([np.asarray(we_src), np.asarray(we_rel),
                            np.asarray(we_dst)], axis=0)        # (2F+2, F)
        ein = np.concatenate([feat[src_idx], edge_rel, feat[dst_idx]], axis=-1)
        w_att = np.concatenate([wa_src[0], wa_rel[0], wa_dst[:, 0]])
        s = ein @ w_att
        s = np.where(s >= 0, s, 0.2 * s)
        attn = np.zeros_like(s)
        for j in range(Nd):
            sel = dst_idx == j
            if sel.any():
                e = np.exp(s[sel] - s[sel].max())
                attn[sel] = e / e.sum()
        weighted = attn[:, None] * (ein @ W)
        out = np.zeros((Nd, feat.shape[1]), np.float32)
        np.add.at(out, dst_idx, weighted)
        feat = np.maximum(out, 0.0)
    return feat


# ---------------------------------------------------------------------------
if __name__ == "__main__":
    N, F = 16, 32                            # num_actors, actor_feature_len
    cfg = {'agent_dist': 30.0, 'nearest_number': 4, 'dropout': 0.1}
    num_layers = 2

    key = jax.random.PRNGKey(0)
    key, kf, kp, kq, ka, kw = jax.random.split(key, 6)
    actor_features = jax.random.normal(kf, (N, F), jnp.float32)
    src_centers = jax.random.uniform(kp, (N, 2), jnp.float32, -10.0, 10.0)
    dst_centers = src_centers + 0.1 * jax.random.normal(kq, (N, 2), jnp.float32)
    angles = jax.random.uniform(ka, (N,), jnp.float32, 0.0, 2 * np.pi)
    rotate = jnp.stack(
        [jnp.stack([jnp.cos(angles), -jnp.sin(angles)], axis=-1),
         jnp.stack([jnp.sin(angles), jnp.cos(angles)], axis=-1)], axis=-2)  # (N,2,2)

    model = Actor2ActorAttentionPallas(F, num_layers, cfg, kw)
    out, rel_relation = model(actor_features, src_centers, dst_centers, rotate)
    out = jax.block_until_ready(out)

    ref = reference_forward(actor_features, src_centers, dst_centers, rotate,
                            model.ref_layers, cfg['agent_dist'],
                            cfg['nearest_number'])
    # tolerance reflects bf16 edge tensors, bf16 logit chain (v6e/v7x), bf16
    # MXU operands and the approx reciprocal; f32 softmax semantics preserved.
    np.testing.assert_allclose(np.asarray(out), ref, rtol=6e-2, atol=6e-2)

    print("KERNEL_OK")
</pallas_src>

<mosaic_0001>
module attributes {stable_mosaic.version = 11 : i64} {
  func.func @_graph_attention_kernel(%arg0: i32, %arg1: memref<64x128xbf16, #tpu.memory_space<vmem>>, %arg2: memref<64x128xbf16, #tpu.memory_space<vmem>>, %arg3: memref<64x128xbf16, #tpu.memory_space<vmem>>, %arg4: memref<128x128xbf16, #tpu.memory_space<vmem>>, %arg5: memref<64x128xf32, #tpu.memory_space<vmem>>, %arg6: memref<64x1xf32, #tpu.memory_space<vmem>>, %arg7: memref<1x128xf32, #tpu.memory_space<vmem>>, %arg8: memref<2x128xf32, #tpu.memory_space<vmem>>, %arg9: memref<1x2xf32, #tpu.memory_space<smem>>, %arg10: memref<64x128xf32, #tpu.memory_space<vmem>>) attributes {dimension_semantics = [#tpu.dimension_semantics<parallel>], iteration_bounds = array<i64: 2>, scalar_prefetch = 0 : i64, scratch_operands = 0 : i64, tpu.core_type = #tpu.core_type<tc>, window_params = [{transform_indices = @transform_0, window_bounds = array<i64: 64, 128>}, {transform_indices = @transform_1, window_bounds = array<i64: 64, 128>}, {transform_indices = @transform_2, window_bounds = array<i64: 64, 128>}, {pipeline_mode = #tpu.pipeline_mode<synchronous>, transform_indices = @transform_3, window_bounds = array<i64: 128, 128>}, {transform_indices = @transform_4, window_bounds = array<i64: 64, 128>}, {transform_indices = @transform_5, window_bounds = array<i64: 64, 1>}, {pipeline_mode = #tpu.pipeline_mode<synchronous>, transform_indices = @transform_6, window_bounds = array<i64: 1, 128>}, {pipeline_mode = #tpu.pipeline_mode<synchronous>, transform_indices = @transform_7, window_bounds = array<i64: 2, 128>}, {transform_indices = @transform_8, window_bounds = array<i64: 1, 2>}, {transform_indices = @transform_9, window_bounds = array<i64: 64, 128>}]} {
    %c0 = arith.constant 0 : index
    %c0_0 = arith.constant 0 : index
    %0 = vector.load %arg1[%c0, %c0_0] : memref<64x128xbf16, #tpu.memory_space<vmem>>, vector<64x128xbf16>
    %c0_1 = arith.constant 0 : index
    %c0_2 = arith.constant 0 : index
    %1 = vector.load %arg2[%c0_1, %c0_2] : memref<64x128xbf16, #tpu.memory_space<vmem>>, vector<64x128xbf16>
    %c0_3 = arith.constant 0 : index
    %c0_4 = arith.constant 0 : index
    %2 = vector.load %arg3[%c0_3, %c0_4] : memref<64x128xbf16, #tpu.memory_space<vmem>>, vector<64x128xbf16>
    %c0_5 = arith.constant 0 : index
    %c0_6 = arith.constant 0 : index
    %3 = memref.load %arg9[%c0_5, %c0_6] : memref<1x2xf32, #tpu.memory_space<smem>>
    %c0_7 = arith.constant 0 : index
    %c1 = arith.constant 1 : index
    %4 = memref.load %arg9[%c0_7, %c1] : memref<1x2xf32, #tpu.memory_space<smem>>
    %5 = arith.extf %0 : vector<64x128xbf16> to vector<64x128xf32>
    %6 = vector.broadcast %3 : f32 to vector<64x128xf32>
    %7 = arith.mulf %5, %6 : vector<64x128xf32>
    %8 = arith.extf %1 : vector<64x128xbf16> to vector<64x128xf32>
    %9 = vector.broadcast %4 : f32 to vector<64x128xf32>
    %10 = arith.mulf %8, %9 : vector<64x128xf32>
    %11 = arith.addf %7, %10 : vector<64x128xf32>
    %c0_8 = arith.constant 0 : index
    %c0_9 = arith.constant 0 : index
    %12 = vector.load %arg6[%c0_8, %c0_9] : memref<64x1xf32, #tpu.memory_space<vmem>>, vector<64x1xf32>
    %13 = vector.broadcast %12 : vector<64x1xf32> to vector<64x128xf32>
    %14 = arith.addf %11, %13 : vector<64x128xf32>
    %c0_10 = arith.constant 0 : index
    %c0_11 = arith.constant 0 : index
    %15 = vector.load %arg7[%c0_10, %c0_11] : memref<1x128xf32, #tpu.memory_space<vmem>>, vector<1x128xf32>
    %16 = vector.broadcast %15 : vector<1x128xf32> to vector<64x128xf32>
    %17 = arith.addf %14, %16 : vector<64x128xf32>
    %cst = arith.constant 2.000000e-01 : f32
    %18 = vector.broadcast %cst : f32 to vector<64x128xf32>
    %19 = arith.mulf %18, %17 : vector<64x128xf32>
    %20 = arith.maximumf %17, %19 : vector<64x128xf32>
    %cst_12 = arith.constant 0.000000e+00 : bf16
    %21 = vector.broadcast %cst_12 : bf16 to vector<64x128xbf16>
    %22 = arith.cmpf ogt, %2, %21 : vector<64x128xbf16>
    %cst_13 = arith.constant -1.000000e+30 : f32
    %23 = vector.broadcast %cst_13 : f32 to vector<64x128xf32>
    %24 = arith.select %22, %20, %23 : vector<64x128xi1>, vector<64x128xf32>
    %cst_14 = arith.constant dense<0xFF800000> : vector<64xf32>
    %25 = vector.multi_reduction <maximumf>, %24, %cst_14 [1] : vector<64x128xf32> to vector<64xf32>
    %26 = vector.shape_cast %25 : vector<64xf32> to vector<64x1xf32>
    %27 = arith.extf %2 : vector<64x128xbf16> to vector<64x128xf32>
    %28 = vector.broadcast %26 : vector<64x1xf32> to vector<64x128xf32>
    %29 = arith.subf %24, %28 : vector<64x128xf32>
    %30 = math.exp %29 : vector<64x128xf32>
    %31 = arith.mulf %30, %27 : vector<64x128xf32>
    %cst_15 = arith.constant dense<0.000000e+00> : vector<64xf32>
    %32 = vector.multi_reduction <add>, %31, %cst_15 [1] : vector<64x128xf32> to vector<64xf32>
    %33 = vector.shape_cast %32 : vector<64xf32> to vector<64x1xf32>
    %34 = arith.truncf %31 : vector<64x128xf32> to vector<64x128xbf16>
    %c0_16 = arith.constant 0 : index
    %c0_17 = arith.constant 0 : index
    %35 = vector.load %arg4[%c0_16, %c0_17] : memref<128x128xbf16, #tpu.memory_space<vmem>>, vector<128x128xbf16>
    %cst_18 = arith.constant dense<0.000000e+00> : vector<64x128xf32>
    %36 = tpu.matmul %34, %35, %cst_18 {dimension_numbers = #tpu.dot_dimension_numbers<[1], [0], [0], [1], [0, 0, 1, 1], [], []>} : vector<64x128xbf16>, vector<128x128xbf16>, vector<64x128xf32> -> vector<64x128xf32>
    %37 = arith.extf %0 : vector<64x128xbf16> to vector<64x128xf32>
    %38 = arith.mulf %31, %37 : vector<64x128xf32>
    %cst_19 = arith.constant dense<0.000000e+00> : vector<64xf32>
    %39 = vector.multi_reduction <add>, %38, %cst_19 [1] : vector<64x128xf32> to vector<64xf32>
    %40 = vector.shape_cast %39 : vector<64xf32> to vector<64x1xf32>
    %41 = arith.extf %1 : vector<64x128xbf16> to vector<64x128xf32>
    %42 = arith.mulf %31, %41 : vector<64x128xf32>
    %cst_20 = arith.constant dense<0.000000e+00> : vector<64xf32>
    %43 = vector.multi_reduction <add>, %42, %cst_20 [1] : vector<64x128xf32> to vector<64xf32>
    %44 = vector.shape_cast %43 : vector<64xf32> to vector<64x1xf32>
    %c0_21 = arith.constant 0 : index
    %c0_22 = arith.constant 0 : index
    %45 = vector.load %arg8[%c0_21, %c0_22] : memref<2x128xf32, #tpu.memory_space<vmem>>, vector<1x128xf32>
    %46 = vector.broadcast %40 : vector<64x1xf32> to vector<64x128xf32>
    %47 = vector.broadcast %45 : vector<1x128xf32> to vector<64x128xf32>
    %48 = arith.mulf %46, %47 : vector<64x128xf32>
    %c1_23 = arith.constant 1 : index
    %c0_24 = arith.constant 0 : index
    %49 = vector.load %arg8[%c1_23, %c0_24] : memref<2x128xf32, #tpu.memory_space<vmem>>, vector<1x128xf32>
    %50 = vector.broadcast %44 : vector<64x1xf32> to vector<64x128xf32>
    %51 = vector.broadcast %49 : vector<1x128xf32> to vector<64x128xf32>
    %52 = arith.mulf %50, %51 : vector<64x128xf32>
    %53 = arith.addf %48, %52 : vector<64x128xf32>
    %cst_25 = arith.constant 1.000000e+00 : f32
    %54 = vector.broadcast %cst_25 : f32 to vector<64x1xf32>
    %55 = arith.maximumf %33, %54 : vector<64x1xf32>
    %56 = tpu.reciprocal %55 {approx = true} : vector<64x1xf32> -> vector<64x1xf32>
    %cst_26 = arith.constant 0.000000e+00 : f32
    %57 = vector.broadcast %cst_26 : f32 to vector<64x1xf32>
    %58 = arith.cmpf ogt, %33, %57 : vector<64x1xf32>
    %59 = arith.extui %58 : vector<64x1xi1> to vector<64x1xi32>
    %60 = arith.sitofp %59 : vector<64x1xi32> to vector<64x1xf32>
    %61 = arith.addf %36, %53 : vector<64x128xf32>
    %62 = vector.broadcast %56 : vector<64x1xf32> to vector<64x128xf32>
    %63 = arith.mulf %61, %62 : vector<64x128xf32>
    %c0_27 = arith.constant 0 : index
    %c0_28 = arith.constant 0 : index
    %64 = vector.load %arg5[%c0_27, %c0_28] : memref<64x128xf32, #tpu.memory_space<vmem>>, vector<64x128xf32>
    %65 = vector.broadcast %60 : vector<64x1xf32> to vector<64x128xf32>
    %66 = arith.mulf %65, %64 : vector<64x128xf32>
    %67 = arith.addf %63, %66 : vector<64x128xf32>
    %cst_29 = arith.constant 0.000000e+00 : f32
    %68 = vector.broadcast %cst_29 : f32 to vector<64x128xf32>
    %69 = arith.maximumf %67, %68 : vector<64x128xf32>
    %c0_30 = arith.constant 0 : index
    %c0_31 = arith.constant 0 : index
    %70 = vector.load %arg10[%c0_30, %c0_31] : memref<64x128xf32, #tpu.memory_space<vmem>>, vector<64x128xf32>
    tpu.vector_store %arg10[%c0_30, %c0_31], %69 {strides = array<i32>} : memref<64x128xf32, #tpu.memory_space<vmem>>, vector<64x128xf32>,
    return
  }
  func.func @transform_0(%arg0: i32) -> (i32, i32) {
    %c0_i32 = arith.constant 0 : i32
    %c0_i32_0 = arith.constant 0 : i32
    return %arg0, %c0_i32 : i32, i32
  }
  func.func @transform_1(%arg0: i32) -> (i32, i32) {
    %c0_i32 = arith.constant 0 : i32
    %c0_i32_0 = arith.constant 0 : i32
    return %arg0, %c0_i32 : i32, i32
  }
  func.func @transform_2(%arg0: i32) -> (i32, i32) {
    %c0_i32 = arith.constant 0 : i32
    %c0_i32_0 = arith.constant 0 : i32
    return %arg0, %c0_i32 : i32, i32
  }
  func.func @transform_3(%arg0: i32) -> (i32, i32) {
    %c0_i32 = arith.constant 0 : i32
    %c0_i32_0 = arith.constant 0 : i32
    %c0_i32_1 = arith.constant 0 : i32
    return %c0_i32, %c0_i32_0 : i32, i32
  }
  func.func @transform_4(%arg0: i32) -> (i32, i32) {
    %c0_i32 = arith.constant 0 : i32
    %c0_i32_0 = arith.constant 0 : i32
    return %arg0, %c0_i32 : i32, i32
  }
  func.func @transform_5(%arg0: i32) -> (i32, i32) {
    %c0_i32 = arith.constant 0 : i32
    %c0_i32_0 = arith.constant 0 : i32
    return %arg0, %c0_i32 : i32, i32
  }
  func.func @transform_6(%arg0: i32) -> (i32, i32) {
    %c0_i32 = arith.constant 0 : i32
    %c0_i32_0 = arith.constant 0 : i32
    %c0_i32_1 = arith.constant 0 : i32
    return %c0_i32, %c0_i32_0 : i32, i32
  }
  func.func @transform_7(%arg0: i32) -> (i32, i32) {
    %c0_i32 = arith.constant 0 : i32
    %c0_i32_0 = arith.constant 0 : i32
    %c0_i32_1 = arith.constant 0 : i32
    return %c0_i32, %c0_i32_0 : i32, i32
  }
  func.func @transform_8(%arg0: i32) -> (i32, i32) {
    %c0_i32 = arith.constant 0 : i32
    %c0_i32_0 = arith.constant 0 : i32
    %c0_i32_1 = arith.constant 0 : i32
    return %c0_i32, %c0_i32_0 : i32, i32
  }
  func.func @transform_9(%arg0: i32) -> (i32, i32) {
    %c0_i32 = arith.constant 0 : i32
    %c0_i32_0 = arith.constant 0 : i32
    return %arg0, %c0_i32 : i32, i32
  }
}

</mosaic_0001>

<llo_original>
// kernel: graph_attention_layer.1
$region0: #{graph_attention_layer.1}
  #allocation0 [shape = 'u32[]', space=smem, size = 0x4, offset = 0x4, fixed_abs, tag = 'smem constant byte address 0x4 - core index']
  #allocation1 [shape = 'u32[144,128]{1,0:T(1,128)}', space=vmem, size = 0x12000, scoped, tag = 'internal scratch']
  %s0 = inlined_call_operand.vmem [shape: bf16[128,128], index: 0, kind: input, shape index: {}]
  %s1 = inlined_call_operand.vmem [shape: bf16[128,128], index: 1, kind: input, shape index: {}]
  %s2 = inlined_call_operand.vmem [shape: bf16[128,128], index: 2, kind: input, shape index: {}]
  %s3 = inlined_call_operand.vmem [shape: bf16[128,128], index: 3, kind: input, shape index: {}]
  %s4 = inlined_call_operand.vmem [shape: f32[128,128], index: 4, kind: input, shape index: {}]
  %s5 = inlined_call_operand.vmem [shape: f32[128,1], index: 5, kind: input, shape index: {}]
  %s6 = inlined_call_operand.vmem [shape: f32[1,128], index: 6, kind: input, shape index: {}]
  %s7 = inlined_call_operand.vmem [shape: f32[2,128], index: 7, kind: input, shape index: {}]
  %s8 = inlined_call_operand.vmem [shape: f32[1,2], index: 8, kind: input, shape index: {}]
  %s9 = inlined_call_operand.hbm [shape: f32[128,128], index: 9, kind: output, shape index: {}]
  %s10 = sld [smem:[#allocation0]]
  $region73: #{graph_attention_layer.1} parent=0
    _
  %s12 = ssub.s32 1, %s10
  %s13 = scalar_select 0, %s12, %s10
  $region1: #{graph_attention_layer.1} parent=0
    #allocation2 [shape = 'u8[512]{0}', space=smem, size = 0x200, scoped, tag = 'input window, operand 8, single buffered']
    #allocation3 [shape = 's32[2]{0}', space=sflag, size = 0x8, scoped, tag = 'scoped memory for graph_attention_layer.1']
    #allocation4 [shape = 's32[2]{0}', space=sflag, size = 0x8, scoped, tag = 'scoped memory for graph_attention_layer.1']
    #allocation5 [shape = 'u8[65536]{0}', space=vmem, size = 0x10000, scoped, tag = 'output window, operand 0']
    %14 = vsyncpa [#allocation4], 0
    %15 = vsyncpa [#allocation3], 0
    %s16 = scalar_lea.sflag [#allocation3], 1
    %17 = vsyncpa %s16, 0
    loop: start=0, step=1, limit=4
    $region2: #{graph_attention_layer.1} parent=1 // loop_pre_header
      _
    $region3: #{graph_attention_layer.1} parent=1 // loop_header
      %s19 = sphi 0, %s23
      %p20 = scmp.ge.s32.totalorder %s19, 4
      %s29 = sphi 0, %s31
      %s32 = sphi 0, %s29
      %s33 = sphi 0, %s32
      %s49 = sphi 0, %s33
      %s55 = sphi 0, %s57
      %s58 = sphi 0, %s55
      %s59 = sphi 0, %s58
      %s75 = sphi 0, %s59
      %s81 = sphi 0, %s83
      %s84 = sphi 0, %s81
      %s85 = sphi 0, %s84
      %s101 = sphi 0, %s85
      %s105 = sphi 0, %s105
      %s107 = sphi 0, %s105
      %s108 = sphi 0, %s107
      %s122 = sphi 0, %s108
      %s128 = sphi 0, %s130
      %s131 = sphi 0, %s128
      %s132 = sphi 0, %s131
      %s148 = sphi 0, %s132
      %s154 = sphi 0, %s156
      %s157 = sphi 0, %s154
      %s158 = sphi 0, %s157
      %s174 = sphi 0, %s158
      %s178 = sphi 0, %s178
      %s180 = sphi 0, %s178
      %s181 = sphi 0, %s180
      %s195 = sphi 0, %s181
      %s199 = sphi 0, %s199
      %s201 = sphi 0, %s199
      %s202 = sphi 0, %s201
      %s216 = sphi 0, %s202
      %s220 = sphi 0, %s220
      %s222 = sphi 0, %s220
      %s223 = sphi 0, %s222
      %s237 = sphi 0, %s223
      %s243 = sphi 0, %s245
      %s246 = sphi 0, %s243
      %s247 = sphi 0, %s246
      %s263 = sphi 0, %s247
    $region4: #{graph_attention_layer.1} parent=1 // loop_header_branch
      %22 = sbr.rel (%p20) target = $region8
    $region5: #{graph_attention_layer.1} parent=1 // loop_body
      %s24 = ssub.s32 %s19, 1
      %s25 = ssub.s32 %s19, 2
      %s26 = sadd.s32 %s19, 1
      %s27 = ssub.s32 %s19, %s26
      %p28 = scmp.eq.s32.totalorder %s27, 0
      %s30 = sadd.s32 %s29, 1
      %s31 = scalar_select %p28, %s29, %s30
      %p34 = pneg %p28
      %p35 = scmp.eq.s32.totalorder %s19, 1
      %p36 = por %p34, %p35
      %p37 = scmp.ne.s32.totalorder %s29, %s32
      %p38 = scmp.eq.s32.totalorder %s19, 0
      %p39 = por %p37, %p38
      %p40 = scmp.ne.s32.totalorder %s29, %s32
      %p41 = scmp.eq.s32.totalorder %s24, 1
      %p42 = por %p40, %p41
      %p43 = scmp.ne.s32.totalorder %s32, %s33
      %p44 = scmp.eq.s32.totalorder %s24, 0
      %p45 = por %p43, %p44
      %p46 = scmp.ne.s32.totalorder %s32, %s33
      %p47 = scmp.eq.s32.totalorder %s25, 1
      %p48 = por %p46, %p47
      %p50 = scmp.ne.s32.totalorder %s33, %s49
      %p51 = scmp.eq.s32.totalorder %s25, 0
      %p52 = por %p50, %p51
      %s53 = ssub.s32 %s19, %s26
      %p54 = scmp.eq.s32.totalorder %s53, 0
      %s56 = sadd.s32 %s55, 1
      %s57 = scalar_select %p54, %s55, %s56
      %p60 = pneg %p54
      %p61 = scmp.eq.s32.totalorder %s19, 1
      %p62 = por %p60, %p61
      %p63 = scmp.ne.s32.totalorder %s55, %s58
      %p64 = scmp.eq.s32.totalorder %s19, 0
      %p65 = por %p63, %p64
      %p66 = scmp.ne.s32.totalorder %s55, %s58
      %p67 = scmp.eq.s32.totalorder %s24, 1
      %p68 = por %p66, %p67
      %p69 = scmp.ne.s32.totalorder %s58, %s59
      %p70 = scmp.eq.s32.totalorder %s24, 0
      %p71 = por %p69, %p70
      %p72 = scmp.ne.s32.totalorder %s58, %s59
      %p73 = scmp.eq.s32.totalorder %s25, 1
      %p74 = por %p72, %p73
      %p76 = scmp.ne.s32.totalorder %s59, %s75
      %p77 = scmp.eq.s32.totalorder %s25, 0
      %p78 = por %p76, %p77
      %s79 = ssub.s32 %s19, %s26
      %p80 = scmp.eq.s32.totalorder %s79, 0
      %s82 = sadd.s32 %s81, 1
      %s83 = scalar_select %p80, %s81, %s82
      %p86 = pneg %p80
      %p87 = scmp.eq.s32.totalorder %s19, 1
      %p88 = por %p86, %p87
      %p89 = scmp.ne.s32.totalorder %s81, %s84
      %p90 = scmp.eq.s32.totalorder %s19, 0
      %p91 = por %p89, %p90
      %p92 = scmp.ne.s32.totalorder %s81, %s84
      %p93 = scmp.eq.s32.totalorder %s24, 1
      %p94 = por %p92, %p93
      %p95 = scmp.ne.s32.totalorder %s84, %s85
      %p96 = scmp.eq.s32.totalorder %s24, 0
      %p97 = por %p95, %p96
      %p98 = scmp.ne.s32.totalorder %s84, %s85
      %p99 = scmp.eq.s32.totalorder %s25, 1
      %p100 = por %p98, %p99
      %p102 = scmp.ne.s32.totalorder %s85, %s101
      %p103 = scmp.eq.s32.totalorder %s25, 0
      %p104 = por %p102, %p103
      %s106 = sadd.s32 %s105, 1
      %p109 = scmp.eq.s32.totalorder %s19, 1
      %p110 = scmp.ne.s32.totalorder %s105, %s107
      %p111 = scmp.eq.s32.totalorder %s19, 0
      %p112 = por %p110, %p111
      %p113 = scmp.ne.s32.totalorder %s105, %s107
      %p114 = scmp.eq.s32.totalorder %s24, 1
      %p115 = por %p113, %p114
      %p116 = scmp.ne.s32.totalorder %s107, %s108
      %p117 = scmp.eq.s32.totalorder %s24, 0
      %p118 = por %p116, %p117
      %p119 = scmp.ne.s32.totalorder %s107, %s108
      %p120 = scmp.eq.s32.totalorder %s25, 1
      %p121 = por %p119, %p120
      %p123 = scmp.ne.s32.totalorder %s108, %s122
      %p124 = scmp.eq.s32.totalorder %s25, 0
      %p125 = por %p123, %p124
      %s126 = ssub.s32 %s19, %s26
      %p127 = scmp.eq.s32.totalorder %s126, 0
      %s129 = sadd.s32 %s128, 1
      %s130 = scalar_select %p127, %s128, %s129
      %p133 = pneg %p127
      %p134 = scmp.eq.s32.totalorder %s19, 1
      %p135 = por %p133, %p134
      %p136 = scmp.ne.s32.totalorder %s128, %s131
      %p137 = scmp.eq.s32.totalorder %s19, 0
      %p138 = por %p136, %p137
      %p139 = scmp.ne.s32.totalorder %s128, %s131
      %p140 = scmp.eq.s32.totalorder %s24, 1
      %p141 = por %p139, %p140
      %p142 = scmp.ne.s32.totalorder %s131, %s132
      %p143 = scmp.eq.s32.totalorder %s24, 0
      %p144 = por %p142, %p143
      %p145 = scmp.ne.s32.totalorder %s131, %s132
      %p146 = scmp.eq.s32.totalorder %s25, 1
      %p147 = por %p145, %p146
      %p149 = scmp.ne.s32.totalorder %s132, %s148
      %p150 = scmp.eq.s32.totalorder %s25, 0
      %p151 = por %p149, %p150
      %s152 = ssub.s32 %s19, %s26
      %p153 = scmp.eq.s32.totalorder %s152, 0
      %s155 = sadd.s32 %s154, 1
      %s156 = scalar_select %p153, %s154, %s155
      %p159 = pneg %p153
      %p160 = scmp.eq.s32.totalorder %s19, 1
      %p161 = por %p159, %p160
      %p162 = scmp.ne.s32.totalorder %s154, %s157
      %p163 = scmp.eq.s32.totalorder %s19, 0
      %p164 = por %p162, %p163
      %p165 = scmp.ne.s32.totalorder %s154, %s157
      %p166 = scmp.eq.s32.totalorder %s24, 1
      %p167 = por %p165, %p166
      %p168 = scmp.ne.s32.totalorder %s157, %s158
      %p169 = scmp.eq.s32.totalorder %s24, 0
      %p170 = por %p168, %p169
      %p171 = scmp.ne.s32.totalorder %s157, %s158
      %p172 = scmp.eq.s32.totalorder %s25, 1
      %p173 = por %p171, %p172
      %p175 = scmp.ne.s32.totalorder %s158, %s174
      %p176 = scmp.eq.s32.totalorder %s25, 0
      %p177 = por %p175, %p176
      %s179 = sadd.s32 %s178, 1
      %p182 = scmp.eq.s32.totalorder %s19, 1
      %p183 = scmp.ne.s32.totalorder %s178, %s180
      %p184 = scmp.eq.s32.totalorder %s19, 0
      %p185 = por %p183, %p184
      %p186 = scmp.ne.s32.totalorder %s178, %s180
      %p187 = scmp.eq.s32.totalorder %s24, 1
      %p188 = por %p186, %p187
      %p189 = scmp.ne.s32.totalorder %s180, %s181
      %p190 = scmp.eq.s32.totalorder %s24, 0
      %p191 = por %p189, %p190
      %p192 = scmp.ne.s32.totalorder %s180, %s181
      %p193 = scmp.eq.s32.totalorder %s25, 1
      %p194 = por %p192, %p193
      %p196 = scmp.ne.s32.totalorder %s181, %s195
      %p197 = scmp.eq.s32.totalorder %s25, 0
      %p198 = por %p196, %p197
      %s200 = sadd.s32 %s199, 1
      %p203 = scmp.eq.s32.totalorder %s19, 1
      %p204 = scmp.ne.s32.totalorder %s199, %s201
      %p205 = scmp.eq.s32.totalorder %s19, 0
      %p206 = por %p204, %p205
      %p207 = scmp.ne.s32.totalorder %s199, %s201
      %p208 = scmp.eq.s32.totalorder %s24, 1
      %p209 = por %p207, %p208
      %p210 = scmp.ne.s32.totalorder %s201, %s202
      %p211 = scmp.eq.s32.totalorder %s24, 0
      %p212 = por %p210, %p211
      %p213 = scmp.ne.s32.totalorder %s201, %s202
      %p214 = scmp.eq.s32.totalorder %s25, 1
      %p215 = por %p213, %p214
      %p217 = scmp.ne.s32.totalorder %s202, %s216
      %p218 = scmp.eq.s32.totalorder %s25, 0
      %p219 = por %p217, %p218
      %s221 = sadd.s32 %s220, 1
      %p224 = scmp.eq.s32.totalorder %s19, 1
      %p225 = scmp.ne.s32.totalorder %s220, %s222
      %p226 = scmp.eq.s32.totalorder %s19, 0
      %p227 = por %p225, %p226
      %p228 = scmp.ne.s32.totalorder %s220, %s222
      %p229 = scmp.eq.s32.totalorder %s24, 1
      %p230 = por %p228, %p229
      %p231 = scmp.ne.s32.totalorder %s222, %s223
      %p232 = scmp.eq.s32.totalorder %s24, 0
      %p233 = por %p231, %p232
      %p234 = scmp.ne.s32.totalorder %s222, %s223
      %p235 = scmp.eq.s32.totalorder %s25, 1
      %p236 = por %p234, %p235
      %p238 = scmp.ne.s32.totalorder %s223, %s237
      %p239 = scmp.eq.s32.totalorder %s25, 0
      %p240 = por %p238, %p239
      %s241 = ssub.s32 %s19, %s26
      %p242 = scmp.eq.s32.totalorder %s241, 0
      %s244 = sadd.s32 %s243, 1
      %s245 = scalar_select %p242, %s243, %s244
      %p248 = pneg %p242
      %p249 = scmp.eq.s32.totalorder %s19, 1
      %p250 = por %p248, %p249
      %p251 = scmp.ne.s32.totalorder %s243, %s246
      %p252 = scmp.eq.s32.totalorder %s19, 0
      %p253 = por %p251, %p252
      %p254 = scmp.ne.s32.totalorder %s243, %s246
      %p255 = scmp.eq.s32.totalorder %s24, 1
      %p256 = por %p254, %p255
      %p257 = scmp.ne.s32.totalorder %s246, %s247
      %p258 = scmp.eq.s32.totalorder %s24, 0
      %p259 = por %p257, %p258
      %p260 = scmp.ne.s32.totalorder %s246, %s247
      %p261 = scmp.eq.s32.totalorder %s25, 1
      %p262 = por %p260, %p261
      %p264 = scmp.ne.s32.totalorder %s247, %s263
      %p265 = scmp.eq.s32.totalorder %s25, 0
      %p266 = por %p264, %p265
      %p267 = scmp.le.s32.totalorder 1, %s19
      %p268 = scmp.lt.s32.totalorder %s19, 3
      %p269 = pnand %p267, %p268
      %p270 = pneg %p269
      // Predicated region
      $region9: #{graph_attention_layer.1} parent=5 // pred_check
        _
      $region10: #{graph_attention_layer.1} parent=5 // pred_check_branch
        %272 = sbr.rel (%p269) target = $region12
      $region11: #{graph_attention_layer.1} parent=5 // pred_region
        %s273 = ssub.s32 %s19, 1
        // Predicated region
        $region13: #{graph_attention_layer.1} parent=11 // pred_check
          %p274 = pneg %p118
        $region14: #{graph_attention_layer.1} parent=11 // pred_check_branch
          %276 = sbr.rel (%p274) target = $region16
        $region15: #{graph_attention_layer.1} parent=11 // pred_region
          _
        $region16: #{graph_attention_layer.1} parent=11 // pred_fallthru
          _
        // Predicated region
        $region17: #{graph_attention_layer.1} parent=11 // pred_check
          %p277 = pneg %p191
        $region18: #{graph_attention_layer.1} parent=11 // pred_check_branch
          %279 = sbr.rel (%p277) target = $region20
        $region19: #{graph_attention_layer.1} parent=11 // pred_region
          _
        $region20: #{graph_attention_layer.1} parent=11 // pred_fallthru
          _
        // Predicated region
        $region21: #{graph_attention_layer.1} parent=11 // pred_check
          %p280 = pneg %p212
        $region22: #{graph_attention_layer.1} parent=11 // pred_check_branch
          %282 = sbr.rel (%p280) target = $region24
        $region23: #{graph_attention_layer.1} parent=11 // pred_region
          _
        $region24: #{graph_attention_layer.1} parent=11 // pred_fallthru
          _
        // Predicated region
        $region25: #{graph_attention_layer.1} parent=11 // pred_check
          %p283 = pneg %p233
        $region26: #{graph_attention_layer.1} parent=11 // pred_check_branch
          %285 = sbr.rel (%p283) target = $region28
        $region27: #{graph_attention_layer.1} parent=11 // pred_region
          %s287 = ssub.s32 16, 16
          %288 = vsyncadd [#allocation4], %s287
          %s290 = sshll.u32 %s8, 4
          %s291 = int_to_ptr.vmem [resolvable:$true] %s290
          %293 = dma.vmem_to_smem %s291, 16, [#allocation2], [#allocation4]
        $region28: #{graph_attention_layer.1} parent=11 // pred_fallthru
          _
      $region12: #{graph_attention_layer.1} parent=5 // pred_fallthru
        _
      %p294 = scmp.lt.s32.totalorder %s19, 2
      // Predicated region
      $region29: #{graph_attention_layer.1} parent=5 // pred_check
        %p295 = pneg %p294
      $region30: #{graph_attention_layer.1} parent=5 // pred_check_branch
        %297 = sbr.rel (%p295) target = $region32
      $region31: #{graph_attention_layer.1} parent=5 // pred_region
        // Predicated region
        $region33: #{graph_attention_layer.1} parent=31 // pred_check
          %p298 = pneg %p39
        $region34: #{graph_attention_layer.1} parent=31 // pred_check_branch
          %300 = sbr.rel (%p298) target = $region36
        $region35: #{graph_attention_layer.1} parent=31 // pred_region
          %s301 = smul.u32 8, %s19
          %p302 = scmp.lt.s32.totalorder %s301, 15
          %s303 = scalar_select %p302, %s301, 15
          %s304 = smul.addr %s303, 4
          %s305 = scalar_lea.vmem %s0, %s304
          %s306 = smul.u32 8, %s19
        $region36: #{graph_attention_layer.1} parent=31 // pred_fallthru
          _
        // Predicated region
        $region37: #{graph_attention_layer.1} parent=31 // pred_check
          %p307 = pneg %p65
        $region38: #{graph_attention_layer.1} parent=31 // pred_check_branch
          %309 = sbr.rel (%p307) target = $region40
        $region39: #{graph_attention_layer.1} parent=31 // pred_region
          %s310 = smul.u32 8, %s19
          %p311 = scmp.lt.s32.totalorder %s310, 15
          %s312 = scalar_select %p311, %s310, 15
          %s313 = smul.addr %s312, 4
          %s314 = scalar_lea.vmem %s1, %s313
          %s315 = smul.u32 8, %s19
        $region40: #{graph_attention_layer.1} parent=31 // pred_fallthru
          _
        // Predicated region
        $region41: #{graph_attention_layer.1} parent=31 // pred_check
          %p316 = pneg %p91
        $region42: #{graph_attention_layer.1} parent=31 // pred_check_branch
          %318 = sbr.rel (%p316) target = $region44
        $region43: #{graph_attention_layer.1} parent=31 // pred_region
          %s319 = smul.u32 8, %s19
          %p320 = scmp.lt.s32.totalorder %s319, 15
          %s321 = scalar_select %p320, %s319, 15
          %s322 = smul.addr %s321, 4
          %s323 = scalar_lea.vmem %s2, %s322
          %s324 = smul.u32 8, %s19
        $region44: #{graph_attention_layer.1} parent=31 // pred_fallthru
          _
        // Predicated region
        $region45: #{graph_attention_layer.1} parent=31 // pred_check
          %p325 = pneg %p138
        $region46: #{graph_attention_layer.1} parent=31 // pred_check_branch
          %327 = sbr.rel (%p325) target = $region48
        $region47: #{graph_attention_layer.1} parent=31 // pred_region
          %s328 = smul.u32 8, %s19
          %p329 = scmp.lt.s32.totalorder %s328, 15
          %s330 = scalar_select %p329, %s328, 15
          %s331 = smul.addr %s330, 8
          %s332 = scalar_lea.vmem %s4, %s331
          %s333 = smul.u32 8, %s19
        $region48: #{graph_attention_layer.1} parent=31 // pred_fallthru
          _
        // Predicated region
        $region49: #{graph_attention_layer.1} parent=31 // pred_check
          %p334 = pneg %p164
        $region50: #{graph_attention_layer.1} parent=31 // pred_check_branch
          %336 = sbr.rel (%p334) target = $region52
        $region51: #{graph_attention_layer.1} parent=31 // pred_region
          %s337 = smul.u32 8, %s19
          %p338 = scmp.lt.s32.totalorder %s337, 15
          %s339 = scalar_select %p338, %s337, 15
          %s340 = smul.addr %s339, 8
          %s341 = scalar_lea.vmem %s5, %s340
          %s342 = smul.u32 8, %s19
        $region52: #{graph_attention_layer.1} parent=31 // pred_fallthru
          _
      $region32: #{graph_attention_layer.1} parent=5 // pred_fallthru
        _
      %p343 = scmp.le.s32.totalorder 1, %s19
      %p344 = scmp.lt.s32.totalorder %s19, 3
      %p345 = pnand %p343, %p344
      %p346 = pneg %p345
      // Predicated region
      $region53: #{graph_attention_layer.1} parent=5 // pred_check
        _
      $region54: #{graph_attention_layer.1} parent=5 // pred_check_branch
        %348 = sbr.rel (%p345) target = $region56
      $region55: #{graph_attention_layer.1} parent=5 // pred_region
        %s349 = ssub.s32 %s19, 1
        // Predicated region
        $region57: #{graph_attention_layer.1} parent=55 // pred_check
          %p350 = pneg %p233
        $region58: #{graph_attention_layer.1} parent=55 // pred_check_branch
          %352 = sbr.rel (%p350) target = $region60
        $region59: #{graph_attention_layer.1} parent=55 // pred_region
          %353 = dma.done [#allocation4], 16
        $region60: #{graph_attention_layer.1} parent=55 // pred_fallthru
          _
        %354 = sfence
        %s355 = smul.u32 8, %s24
        %p356 = scmp.lt.s32.totalorder %s355, 15
        %s357 = scalar_select %p356, %s355, 15
        %s358 = smul.addr %s357, 4
        %s359 = scalar_lea.vmem %s0, %s358
        %p360 = pneg %p45
        %p361 = pneg %p42
        %s362 = smul.u32 8, %s24
        %p363 = scmp.lt.s32.totalorder %s362, 15
        %s364 = scalar_select %p363, %s362, 15
        %s365 = smul.addr %s364, 4
        %s366 = scalar_lea.vmem %s1, %s365
        %p367 = pneg %p71
        %p368 = pneg %p68
        %s369 = smul.u32 8, %s24
        %p370 = scmp.lt.s32.totalorder %s369, 15
        %s371 = scalar_select %p370, %s369, 15
        %s372 = smul.addr %s371, 4
        %s373 = scalar_lea.vmem %s2, %s372
        %p374 = pneg %p97
        %p375 = pneg %p94
        %p376 = pneg %p118
        %p377 = pneg %p115
        %s378 = smul.u32 8, %s24
        %p379 = scmp.lt.s32.totalorder %s378, 15
        %s380 = scalar_select %p379, %s378, 15
        %s381 = smul.addr %s380, 8
        %s382 = scalar_lea.vmem %s4, %s381
        %p383 = pneg %p144
        %p384 = pneg %p141
        %s385 = smul.u32 8, %s24
        %p386 = scmp.lt.s32.totalorder %s385, 15
        %s387 = scalar_select %p386, %s385, 15
        %s388 = smul.addr %s387, 8
        %s389 = scalar_lea.vmem %s5, %s388
        %p390 = pneg %p170
        %p391 = pneg %p167
        %p392 = pneg %p191
        %p393 = pneg %p188
        %p394 = pneg %p212
        %p395 = pneg %p209
        %p396 = pneg %p233
        %p397 = pneg %p230
        %p398 = pneg %p259
        %p399 = pneg %p256
        %s400 = sand.u32 %s246, 1
        %s401 = scalar_lea.sflag [#allocation3], %s400
        %s402 = sand.u32 %s246, 1
        %s403 = smul.addr %s402, 64
        %s404 = scalar_lea.vmem [#allocation5], %s403
        %s405 = smul.u32 8, %s24
        %p406 = scmp.lt.s32.totalorder %s405, 15
        %s407 = scalar_select %p406, %s405, 15
        %s408 = smul.addr %s407, 4
        %s409 = scalar_lea.vmem %s0, %s408
        %s410 = smul.u32 8, %s24
        %s411 = smul.u32 8, %s24
        %p412 = scmp.lt.s32.totalorder %s411, 15
        %s413 = scalar_select %p412, %s411, 15
        %s414 = smul.addr %s413, 4
        %s415 = scalar_lea.vmem %s1, %s414
        %s416 = smul.u32 8, %s24
        %s417 = smul.u32 8, %s24
        %p418 = scmp.lt.s32.totalorder %s417, 15
        %s419 = scalar_select %p418, %s417, 15
        %s420 = smul.addr %s419, 4
        %s421 = scalar_lea.vmem %s2, %s420
        %s422 = smul.u32 8, %s24
        %s423 = smul.u32 8, %s24
        %p424 = scmp.lt.s32.totalorder %s423, 15
        %s425 = scalar_select %p424, %s423, 15
        %s426 = smul.addr %s425, 8
        %s427 = scalar_lea.vmem %s4, %s426
        %s428 = smul.u32 8, %s24
        %s429 = smul.u32 8, %s24
        %p430 = scmp.lt.s32.totalorder %s429, 15
        %s431 = scalar_select %p430, %s429, 15
        %s432 = smul.addr %s431, 8
        %s433 = scalar_lea.vmem %s5, %s432
        %s434 = smul.u32 8, %s24
        %s435 = smul.u32 8, %s24
        %v439 = vld [vmem:[%s409] sm:$0xf]
        %v440 = vld [vmem:[%s409 + $0x4] sm:$0xf]
        %v441 = vld [vmem:[%s409 + $0x8] sm:$0xf]
        %v442 = vld [vmem:[%s409 + $0xc] sm:$0xf]
        %v443 = vld [vmem:[%s409 + $0x10] sm:$0xf]
        %v444 = vld [vmem:[%s409 + $0x14] sm:$0xf]
        %v445 = vld [vmem:[%s409 + $0x18] sm:$0xf]
        %v446 = vld [vmem:[%s409 + $0x1c] sm:$0xf]
        %v447 = vld [vmem:[%s415] sm:$0xf]
        %v448 = vld [vmem:[%s415 + $0x4] sm:$0xf]
        %v449 = vld [vmem:[%s415 + $0x8] sm:$0xf]
        %v450 = vld [vmem:[%s415 + $0xc] sm:$0xf]
        %v451 = vld [vmem:[%s415 + $0x10] sm:$0xf]
        %v452 = vld [vmem:[%s415 + $0x14] sm:$0xf]
        %v453 = vld [vmem:[%s415 + $0x18] sm:$0xf]
        %v454 = vld [vmem:[%s415 + $0x1c] sm:$0xf]
        %v455 = vld [vmem:[%s421] sm:$0xf]
        %v456 = vld [vmem:[%s421 + $0x4] sm:$0xf]
        %v457 = vld [vmem:[%s421 + $0x8] sm:$0xf]
        %v458 = vld [vmem:[%s421 + $0xc] sm:$0xf]
        %v459 = vld [vmem:[%s421 + $0x10] sm:$0xf]
        %v460 = vld [vmem:[%s421 + $0x14] sm:$0xf]
        %v461 = vld [vmem:[%s421 + $0x18] sm:$0xf]
        %v462 = vld [vmem:[%s421 + $0x1c] sm:$0xf]
        %s463 = sld [smem:[#allocation2]]
        %s464 = sld [smem:[#allocation2 + $0x1]]
        %v465 = vunpack.c.l.bf16 %v439
        %v466 = vunpack.c.l.bf16 %v440
        %v467 = vunpack.c.l.bf16 %v441
        %v468 = vunpack.c.l.bf16 %v442
        %v469 = vunpack.c.l.bf16 %v443
        %v470 = vunpack.c.l.bf16 %v444
        %v471 = vunpack.c.l.bf16 %v445
        %v472 = vunpack.c.l.bf16 %v446
        %v473 = vstv %s463
        %v474 = vmul.f32 %v465, %v473
        %v475 = vmul.f32 %v466, %v473
        %v476 = vmul.f32 %v467, %v473
        %v477 = vmul.f32 %v468, %v473
        %v478 = vmul.f32 %v469, %v473
        %v479 = vmul.f32 %v470, %v473
        %v480 = vmul.f32 %v471, %v473
        %v481 = vmul.f32 %v472, %v473
        %v482 = vunpack.c.l.bf16 %v447
        %v483 = vunpack.c.l.bf16 %v448
        %v484 = vunpack.c.l.bf16 %v449
        %v485 = vunpack.c.l.bf16 %v450
        %v486 = vunpack.c.l.bf16 %v451
        %v487 = vunpack.c.l.bf16 %v452
        %v488 = vunpack.c.l.bf16 %v453
        %v489 = vunpack.c.l.bf16 %v454
        %v490 = vstv %s464
        %v491 = vmul.f32 %v482, %v490
        %v492 = vmul.f32 %v483, %v490
        %v493 = vmul.f32 %v484, %v490
        %v494 = vmul.f32 %v485, %v490
        %v495 = vmul.f32 %v486, %v490
        %v496 = vmul.f32 %v487, %v490
        %v497 = vmul.f32 %v488, %v490
        %v498 = vmul.f32 %v489, %v490
        %v499 = vadd.f32 %v474, %v491
        %v500 = vadd.f32 %v475, %v492
        %v501 = vadd.f32 %v476, %v493
        %v502 = vadd.f32 %v477, %v494
        %v503 = vadd.f32 %v478, %v495
        %v504 = vadd.f32 %v479, %v496
        %v505 = vadd.f32 %v480, %v497
        %v506 = vadd.f32 %v481, %v498
        %v507 = vld [vmem:[%s433] sm:$0xff]
        %v508 = vld [vmem:[%s433 + $0x8] sm:$0xff]
        %v509 = vld [vmem:[%s433 + $0x10] sm:$0xff]
        %v510 = vld [vmem:[%s433 + $0x18] sm:$0xff]
        %v511 = vld [vmem:[%s433 + $0x20] sm:$0xff]
        %v512 = vld [vmem:[%s433 + $0x28] sm:$0xff]
        %v513 = vld [vmem:[%s433 + $0x30] sm:$0xff]
        %v514 = vld [vmem:[%s433 + $0x38] sm:$0xff]
        %516 = vset.pattern.permute.xlu0 0
        %517 = vperm.xlu0 %516, %v507
        %v518 = vpop.permute.xlu0 %517
        %521 = vset.pattern.permute.xlu0 0
        %522 = vperm.xlu0 %521, %v508
        %v523 = vpop.permute.xlu0 %522
        %526 = vset.pattern.permute.xlu0 0
        %527 = vperm.xlu0 %526, %v509
        %v528 = vpop.permute.xlu0 %527
        %531 = vset.pattern.permute.xlu0 0
        %532 = vperm.xlu0 %531, %v510
        %v533 = vpop.permute.xlu0 %532
        %536 = vset.pattern.permute.xlu0 0
        %537 = vperm.xlu0 %536, %v511
        %v538 = vpop.permute.xlu0 %537
        %541 = vset.pattern.permute.xlu0 0
        %542 = vperm.xlu0 %541, %v512
        %v543 = vpop.permute.xlu0 %542
        %546 = vset.pattern.permute.xlu0 0
        %547 = vperm.xlu0 %546, %v513
        %v548 = vpop.permute.xlu0 %547
        %551 = vset.pattern.permute.xlu0 0
        %552 = vperm.xlu0 %551, %v514
        %v553 = vpop.permute.xlu0 %552
        %v555 = vadd.f32 %v499, %v518
        %v556 = vadd.f32 %v500, %v523
        %v557 = vadd.f32 %v501, %v528
        %v558 = vadd.f32 %v502, %v533
        %v559 = vadd.f32 %v503, %v538
        %v560 = vadd.f32 %v504, %v543
        %v561 = vadd.f32 %v505, %v548
        %v562 = vadd.f32 %v506, %v553
        %v563 = vld [vmem:[%s6] sm:$0x1]
        %v565 = vlaneseq
        %v566 = vshrl.u32 %v565, 7
        %v567 = vsub.s32 0, %v566
        %v568 = vrot.slane %v563, %v567
        %v570 = vadd.f32 %v555, %v568
        %v571 = vadd.f32 %v556, %v568
        %v572 = vadd.f32 %v557, %v568
        %v573 = vadd.f32 %v558, %v568
        %v574 = vadd.f32 %v559, %v568
        %v575 = vadd.f32 %v560, %v568
        %v576 = vadd.f32 %v561, %v568
        %v577 = vadd.f32 %v562, %v568
        %v578 = vmul.f32 %v570, 0.2
        %v579 = vmul.f32 %v571, 0.2
        %v580 = vmul.f32 %v572, 0.2
        %v581 = vmul.f32 %v573, 0.2
        %v582 = vmul.f32 %v574, 0.2
        %v583 = vmul.f32 %v575, 0.2
        %v584 = vmul.f32 %v576, 0.2
        %v585 = vmul.f32 %v577, 0.2
        %v586 = vmax.f32 %v570, %v578
        %v587 = vmax.f32 %v571, %v579
        %v588 = vmax.f32 %v572, %v580
        %v589 = vmax.f32 %v573, %v581
        %v590 = vmax.f32 %v574, %v582
        %v591 = vmax.f32 %v575, %v583
        %v592 = vmax.f32 %v576, %v584
        %v593 = vmax.f32 %v577, %v585
        %vm594 = vcmp.gt.bf16.partialorder %v455, 0
        %vm595 = vcmp.gt.bf16.partialorder %v456, 0
        %vm596 = vcmp.gt.bf16.partialorder %v457, 0
        %vm597 = vcmp.gt.bf16.partialorder %v458, 0
        %vm598 = vcmp.gt.bf16.partialorder %v459, 0
        %vm599 = vcmp.gt.bf16.partialorder %v460, 0
        %vm600 = vcmp.gt.bf16.partialorder %v461, 0
        %vm601 = vcmp.gt.bf16.partialorder %v462, 0
        %v602 = vsel %vm594, 65537, 0
        %v603 = vsel %vm595, 65537, 0
        %v604 = vsel %vm596, 65537, 0
        %v605 = vsel %vm597, 65537, 0
        %v606 = vsel %vm598, 65537, 0
        %v607 = vsel %vm599, 65537, 0
        %v608 = vsel %vm600, 65537, 0
        %v609 = vsel %vm601, 65537, 0
        %v610 = vunpack.c.l.b16 %v602
        %v611 = vunpack.c.l.b16 %v603
        %v612 = vunpack.c.l.b16 %v604
        %v613 = vunpack.c.l.b16 %v605
        %v614 = vunpack.c.l.b16 %v606
        %v615 = vunpack.c.l.b16 %v607
        %v616 = vunpack.c.l.b16 %v608
        %v617 = vunpack.c.l.b16 %v609
        %vm618 = vcmp.ne.s32.totalorder %v610, 0
        %vm619 = vcmp.ne.s32.totalorder %v611, 0
        %vm620 = vcmp.ne.s32.totalorder %v612, 0
        %vm621 = vcmp.ne.s32.totalorder %v613, 0
        %vm622 = vcmp.ne.s32.totalorder %v614, 0
        %vm623 = vcmp.ne.s32.totalorder %v615, 0
        %vm624 = vcmp.ne.s32.totalorder %v616, 0
        %vm625 = vcmp.ne.s32.totalorder %v617, 0
        %v626 = vsel %vm618, %v586, -1e+30
        %v627 = vsel %vm619, %v587, -1e+30
        %v628 = vsel %vm620, %v588, -1e+30
        %v629 = vsel %vm621, %v589, -1e+30
        %v630 = vsel %vm622, %v590, -1e+30
        %v631 = vsel %vm623, %v591, -1e+30
        %v632 = vsel %vm624, %v592, -1e+30
        %v633 = vsel %vm625, %v593, -1e+30
        %634 = vmax.xlane.f32.xlu0 %v626
        %v635 = vpop.xlane.xlu0 %634
        %636 = vmax.xlane.f32.xlu0 %v627
        %v637 = vpop.xlane.xlu0 %636
        %638 = vmax.xlane.f32.xlu0 %v628
        %v639 = vpop.xlane.xlu0 %638
        %640 = vmax.xlane.f32.xlu0 %v629
        %v641 = vpop.xlane.xlu0 %640
        %642 = vmax.xlane.f32.xlu0 %v630
        %v643 = vpop.xlane.xlu0 %642
        %644 = vmax.xlane.f32.xlu0 %v631
        %v645 = vpop.xlane.xlu0 %644
        %646 = vmax.xlane.f32.xlu0 %v632
        %v647 = vpop.xlane.xlu0 %646
        %648 = vmax.xlane.f32.xlu0 %v633
        %v649 = vpop.xlane.xlu0 %648
        %v650 = vunpack.c.l.bf16 %v455
        %v651 = vunpack.c.l.bf16 %v456
        %v652 = vunpack.c.l.bf16 %v457
        %v653 = vunpack.c.l.bf16 %v458
        %v654 = vunpack.c.l.bf16 %v459
        %v655 = vunpack.c.l.bf16 %v460
        %v656 = vunpack.c.l.bf16 %v461
        %v657 = vunpack.c.l.bf16 %v462
        %v658 = vsub.f32 %v626, %v635
        %v659 = vsub.f32 %v627, %v637
        %v660 = vsub.f32 %v628, %v639
        %v661 = vsub.f32 %v629, %v641
        %v662 = vsub.f32 %v630, %v643
        %v663 = vsub.f32 %v631, %v645
        %v664 = vsub.f32 %v632, %v647
        %v665 = vsub.f32 %v633, %v649
        %v666 = vmul.f32 %v658, 1.442695
        %v667 = vpow.pop %v666
        %v668 = vmul.f32 %v659, 1.442695
        %v669 = vpow.pop %v668
        %v670 = vmul.f32 %v660, 1.442695
        %v671 = vpow.pop %v670
        %v672 = vmul.f32 %v661, 1.442695
        %v673 = vpow.pop %v672
        %v674 = vmul.f32 %v662, 1.442695
        %v675 = vpow.pop %v674
        %v676 = vmul.f32 %v663, 1.442695
        %v677 = vpow.pop %v676
        %v678 = vmul.f32 %v664, 1.442695
        %v679 = vpow.pop %v678
        %v680 = vmul.f32 %v665, 1.442695
        %v681 = vpow.pop %v680
        %v682 = vmul.f32 %v667, %v650
        %v683 = vmul.f32 %v669, %v651
        %v684 = vmul.f32 %v671, %v652
        %v685 = vmul.f32 %v673, %v653
        %v686 = vmul.f32 %v675, %v654
        %v687 = vmul.f32 %v677, %v655
        %v688 = vmul.f32 %v679, %v656
        %v689 = vmul.f32 %v681, %v657
        %690 = vadd.xlane.f32.xlu0 %v682
        %v691 = vpop.xlane.xlu0 %690
        %692 = vadd.xlane.f32.xlu0 %v683
        %v693 = vpop.xlane.xlu0 %692
        %694 = vadd.xlane.f32.xlu0 %v684
        %v695 = vpop.xlane.xlu0 %694
        %696 = vadd.xlane.f32.xlu0 %v685
        %v697 = vpop.xlane.xlu0 %696
        %698 = vadd.xlane.f32.xlu0 %v686
        %v699 = vpop.xlane.xlu0 %698
        %700 = vadd.xlane.f32.xlu0 %v687
        %v701 = vpop.xlane.xlu0 %700
        %702 = vadd.xlane.f32.xlu0 %v688
        %v703 = vpop.xlane.xlu0 %702
        %704 = vadd.xlane.f32.xlu0 %v689
        %v705 = vpop.xlane.xlu0 %704
        %v706 = vpack.c.bf16 %v683, %v682
        %v707 = vpack.c.bf16 %v685, %v684
        %v708 = vpack.c.bf16 %v687, %v686
        %v709 = vpack.c.bf16 %v689, %v688
        %v710 = vld [vmem:[%s3] sm:$0xf]
        %v711 = vld [vmem:[%s3 + $0x4] sm:$0xf]
        %v712 = vld [vmem:[%s3 + $0x8] sm:$0xf]
        %v713 = vld [vmem:[%s3 + $0xc] sm:$0xf]
        %v714 = vld [vmem:[%s3 + $0x10] sm:$0xf]
        %v715 = vld [vmem:[%s3 + $0x14] sm:$0xf]
        %v716 = vld [vmem:[%s3 + $0x18] sm:$0xf]
        %v717 = vld [vmem:[%s3 + $0x1c] sm:$0xf]
        %v718 = vld [vmem:[%s3 + $0x20] sm:$0xf]
        %v719 = vld [vmem:[%s3 + $0x24] sm:$0xf]
        %v720 = vld [vmem:[%s3 + $0x28] sm:$0xf]
        %v721 = vld [vmem:[%s3 + $0x2c] sm:$0xf]
        %v722 = vld [vmem:[%s3 + $0x30] sm:$0xf]
        %v723 = vld [vmem:[%s3 + $0x34] sm:$0xf]
        %v724 = vld [vmem:[%s3 + $0x38] sm:$0xf]
        %v725 = vld [vmem:[%s3 + $0x3c] sm:$0xf]
        %v726 = vmul.f32 %v682, %v465
        %v727 = vmul.f32 %v683, %v466
        %v728 = vmul.f32 %v684, %v467
        %v729 = vmul.f32 %v685, %v468
        %v730 = vmul.f32 %v686, %v469
        %v731 = vmul.f32 %v687, %v470
        %v732 = vmul.f32 %v688, %v471
        %v733 = vmul.f32 %v689, %v472
        %734 = vadd.xlane.f32.xlu0 %v726
        %v735 = vpop.xlane.xlu0 %734
        %736 = vadd.xlane.f32.xlu0 %v727
        %v737 = vpop.xlane.xlu0 %736
        %738 = vadd.xlane.f32.xlu0 %v728
        %v739 = vpop.xlane.xlu0 %738
        %740 = vadd.xlane.f32.xlu0 %v729
        %v741 = vpop.xlane.xlu0 %740
        %742 = vadd.xlane.f32.xlu0 %v730
        %v743 = vpop.xlane.xlu0 %742
        %744 = vadd.xlane.f32.xlu0 %v731
        %v745 = vpop.xlane.xlu0 %744
        %746 = vadd.xlane.f32.xlu0 %v732
        %v747 = vpop.xlane.xlu0 %746
        %748 = vadd.xlane.f32.xlu0 %v733
        %v749 = vpop.xlane.xlu0 %748
        %v750 = vmul.f32 %v682, %v482
        %v751 = vmul.f32 %v683, %v483
        %v752 = vmul.f32 %v684, %v484
        %v753 = vmul.f32 %v685, %v485
        %v754 = vmul.f32 %v686, %v486
        %v755 = vmul.f32 %v687, %v487
        %v756 = vmul.f32 %v688, %v488
        %v757 = vmul.f32 %v689, %v489
        %758 = vadd.xlane.f32.xlu0 %v750
        %v759 = vpop.xlane.xlu0 %758
        %760 = vadd.xlane.f32.xlu0 %v751
        %v761 = vpop.xlane.xlu0 %760
        %762 = vadd.xlane.f32.xlu0 %v752
        %v763 = vpop.xlane.xlu0 %762
        %764 = vadd.xlane.f32.xlu0 %v753
        %v765 = vpop.xlane.xlu0 %764
        %766 = vadd.xlane.f32.xlu0 %v754
        %v767 = vpop.xlane.xlu0 %766
        %768 = vadd.xlane.f32.xlu0 %v755
        %v769 = vpop.xlane.xlu0 %768
        %770 = vadd.xlane.f32.xlu0 %v756
        %v771 = vpop.xlane.xlu0 %770
        %772 = vadd.xlane.f32.xlu0 %v757
        %v773 = vpop.xlane.xlu0 %772
        %v774 = vld [vmem:[%s7] sm:$0x1]
        %v775 = vlaneseq
        %v776 = vshrl.u32 %v775, 7
        %v777 = vsub.s32 0, %v776
        %v778 = vrot.slane %v774, %v777
        %v779 = vmul.f32 %v735, %v778
        %v780 = vmul.f32 %v737, %v778
        %v781 = vmul.f32 %v739, %v778
        %v782 = vmul.f32 %v741, %v778
        %v783 = vmul.f32 %v743, %v778
        %v784 = vmul.f32 %v745, %v778
        %v785 = vmul.f32 %v747, %v778
        %v786 = vmul.f32 %v749, %v778
        %v787 = vld [vmem:[%s7 + $0x1] sm:$0x1]
        %v788 = vlaneseq
        %v789 = vshrl.u32 %v788, 7
        %v790 = vsub.s32 0, %v789
        %v791 = vrot.slane %v787, %v790
        %v792 = vmul.f32 %v759, %v791
        %v793 = vmul.f32 %v761, %v791
        %v794 = vmul.f32 %v763, %v791
        %v795 = vmul.f32 %v765, %v791
        %v796 = vmul.f32 %v767, %v791
        %v797 = vmul.f32 %v769, %v791
        %v798 = vmul.f32 %v771, %v791
        %v799 = vmul.f32 %v773, %v791
        %v800 = vadd.f32 %v779, %v792
        %v801 = vadd.f32 %v780, %v793
        %v802 = vadd.f32 %v781, %v794
        %v803 = vadd.f32 %v782, %v795
        %v804 = vadd.f32 %v783, %v796
        %v805 = vadd.f32 %v784, %v797
        %v806 = vadd.f32 %v785, %v798
        %v807 = vadd.f32 %v786, %v799
        %v808 = vmax.f32 %v691, 1.0
        %v809 = vmax.f32 %v693, 1.0
        %v810 = vmax.f32 %v695, 1.0
        %v811 = vmax.f32 %v697, 1.0
        %v812 = vmax.f32 %v699, 1.0
        %v813 = vmax.f32 %v701, 1.0
        %v814 = vmax.f32 %v703, 1.0
        %v815 = vmax.f32 %v705, 1.0
        %v816 = vrcp.pop %v808
        %v817 = vrcp.pop %v809
        %v818 = vrcp.pop %v810
        %v819 = vrcp.pop %v811
        %v820 = vrcp.pop %v812
        %v821 = vrcp.pop %v813
        %v822 = vrcp.pop %v814
        %v823 = vrcp.pop %v815
        %vm824 = vcmp.gt.f32.partialorder %v691, 0.0
        %vm825 = vcmp.gt.f32.partialorder %v693, 0.0
        %vm826 = vcmp.gt.f32.partialorder %v695, 0.0
        %vm827 = vcmp.gt.f32.partialorder %v697, 0.0
        %vm828 = vcmp.gt.f32.partialorder %v699, 0.0
        %vm829 = vcmp.gt.f32.partialorder %v701, 0.0
        %vm830 = vcmp.gt.f32.partialorder %v703, 0.0
        %vm831 = vcmp.gt.f32.partialorder %v705, 0.0
        %v832 = vsel %vm824, 1, 0
        %v833 = vsel %vm825, 1, 0
        %v834 = vsel %vm826, 1, 0
        %v835 = vsel %vm827, 1, 0
        %v836 = vsel %vm828, 1, 0
        %v837 = vsel %vm829, 1, 0
        %v838 = vsel %vm830, 1, 0
        %v839 = vsel %vm831, 1, 0
        %v840 = vcvt.s32.f32 %v832
        %v841 = vcvt.s32.f32 %v833
        %v842 = vcvt.s32.f32 %v834
        %v843 = vcvt.s32.f32 %v835
        %v844 = vcvt.s32.f32 %v836
        %v845 = vcvt.s32.f32 %v837
        %v846 = vcvt.s32.f32 %v838
        %v847 = vcvt.s32.f32 %v839
        %v864 = vunpack.c.l.b16 %v710
        %v865 = vunpack.c.l.b16 %v711
        %v866 = vunpack.c.l.b16 %v712
        %v867 = vunpack.c.l.b16 %v713
        %v868 = vunpack.c.l.b16 %v714
        %v869 = vunpack.c.l.b16 %v715
        %v870 = vunpack.c.l.b16 %v716
        %v871 = vunpack.c.l.b16 %v717
        %v872 = vunpack.c.l.b16 %v718
        %v873 = vunpack.c.l.b16 %v719
        %v874 = vunpack.c.l.b16 %v720
        %v875 = vunpack.c.l.b16 %v721
        %v876 = vunpack.c.l.b16 %v722
        %v877 = vunpack.c.l.b16 %v723
        %v878 = vunpack.c.l.b16 %v724
        %v879 = vunpack.c.l.b16 %v725
        %v880 = vpack.c.b16 %v865, %v864
        %v881 = vpack.c.b16 %v867, %v866
        %v882 = vpack.c.b16 %v869, %v868
        %v883 = vpack.c.b16 %v871, %v870
        %v884 = vpack.c.b16 %v873, %v872
        %v885 = vpack.c.b16 %v875, %v874
        %v886 = vpack.c.b16 %v877, %v876
        %v887 = vpack.c.b16 %v879, %v878
        %896 = vmatprep.subr.bf16.mxu0 0
        %897 = vmatpush1.bf16.msra.mxu0 %v887
        %898 = vmatprep.subr.bf16.mxu0 0
        %899 = vmatpush1.bf16.msra.mxu0 %v886
        %900 = vmatprep.subr.bf16.mxu0 0
        %901 = vmatpush1.bf16.msra.mxu0 %v885
        %902 = vmatprep.subr.bf16.mxu0 0
        %903 = vmatpush1.bf16.msra.mxu0 %v884
        %904 = vmatprep.subr.bf16.mxu0 0
        %905 = vmatpush1.bf16.msra.mxu0 %v883
        %906 = vmatprep.subr.bf16.mxu0 0
        %907 = vmatpush1.bf16.msra.mxu0 %v882
        %908 = vmatprep.subr.bf16.mxu0 0
        %909 = vmatpush1.bf16.msra.mxu0 %v881
        %910 = vmatprep.subr.bf16.mxu0 0
        %911 = vmatpush1.bf16.msra.mxu0 %v880
        %912 = vmatprep.subr.bf16.mxu0 0
        %913 = vmatpush2.bf16.msra.mxu0 0
        %914 = vmatprep.subr.bf16.mxu0 0
        %915 = vmatpush2.bf16.msra.mxu0 0
        %916 = vmatprep.subr.bf16.mxu0 0
        %917 = vmatpush2.bf16.msra.mxu0 0
        %918 = vmatprep.subr.bf16.mxu0 0
        %919 = vmatpush2.bf16.msra.mxu0 0
        %920 = vmatprep.subr.bf16.mxu0 0
        %921 = vmatpush2.bf16.msra.mxu0 0
        %922 = vmatprep.subr.bf16.mxu0 0
        %923 = vmatpush2.bf16.msra.mxu0 0
        %924 = vmatprep.subr.bf16.mxu0 0
        %925 = vmatpush2.bf16.msra.mxu0 0
        %926 = vmatprep.subr.bf16.mxu0 0
        %927 = vmatpush2.bf16.msra.mxu0 0
        %928 = vmatprep.mubr.bf16.mxu0 0
        %929 = vmatmul.mubr.bf16.gmra.mxu0 %v706
        %v930 = vpop.f32.mrf.mxu0
        %v931 = vadd.f32 %v800, %v930
        %v932 = vpop.f32.mrf.mxu0
        %v933 = vpop.f32.mrf.mxu0
        %v934 = vadd.f32 %v801, %v933
        %v935 = vpop.f32.mrf.mxu0
        %936 = vmatprep.mubr.bf16.mxu0 0
        %937 = vmatmul.mubr.bf16.gmra.mxu0 %v707
        %v938 = vpop.f32.mrf.mxu0
        %v939 = vadd.f32 %v802, %v938
        %v940 = vpop.f32.mrf.mxu0
        %v941 = vpop.f32.mrf.mxu0
        %v942 = vadd.f32 %v803, %v941
        %v943 = vpop.f32.mrf.mxu0
        %944 = vmatprep.mubr.bf16.mxu0 0
        %945 = vmatmul.mubr.bf16.gmra.mxu0 %v708
        %v946 = vpop.f32.mrf.mxu0
        %v947 = vadd.f32 %v804, %v946
        %v948 = vpop.f32.mrf.mxu0
        %v949 = vpop.f32.mrf.mxu0
        %v950 = vadd.f32 %v805, %v949
        %v951 = vpop.f32.mrf.mxu0
        %952 = vmatprep.mubr.bf16.mxu0 0
        %953 = vmatmul.mubr.bf16.gmra.mxu0 %v709
        %v954 = vpop.f32.mrf.mxu0
        %v955 = vadd.f32 %v806, %v954
        %v956 = vpop.f32.mrf.mxu0
        %v957 = vpop.f32.mrf.mxu0
        %v958 = vadd.f32 %v807, %v957
        %v959 = vpop.f32.mrf.mxu0
        %960 = vdwg.mxu0
        %v961 = vmul.f32 %v931, %v816
        %v962 = vmul.f32 %v934, %v817
        %v963 = vmul.f32 %v939, %v818
        %v964 = vmul.f32 %v942, %v819
        %v965 = vmul.f32 %v947, %v820
        %v966 = vmul.f32 %v950, %v821
        %v967 = vmul.f32 %v955, %v822
        %v968 = vmul.f32 %v958, %v823
        %v969 = vld [vmem:[%s427] sm:$0xff]
        %v970 = vld [vmem:[%s427 + $0x8] sm:$0xff]
        %v971 = vld [vmem:[%s427 + $0x10] sm:$0xff]
        %v972 = vld [vmem:[%s427 + $0x18] sm:$0xff]
        %v973 = vld [vmem:[%s427 + $0x20] sm:$0xff]
        %v974 = vld [vmem:[%s427 + $0x28] sm:$0xff]
        %v975 = vld [vmem:[%s427 + $0x30] sm:$0xff]
        %v976 = vld [vmem:[%s427 + $0x38] sm:$0xff]
        %v977 = vmul.f32 %v840, %v969
        %v978 = vmul.f32 %v841, %v970
        %v979 = vmul.f32 %v842, %v971
        %v980 = vmul.f32 %v843, %v972
        %v981 = vmul.f32 %v844, %v973
        %v982 = vmul.f32 %v845, %v974
        %v983 = vmul.f32 %v846, %v975
        %v984 = vmul.f32 %v847, %v976
        %v985 = vadd.f32 %v961, %v977
        %v986 = vadd.f32 %v962, %v978
        %v987 = vadd.f32 %v963, %v979
        %v988 = vadd.f32 %v964, %v980
        %v989 = vadd.f32 %v965, %v981
        %v990 = vadd.f32 %v966, %v982
        %v991 = vadd.f32 %v967, %v983
        %v992 = vadd.f32 %v968, %v984
        %v993 = vmax.f32 %v985, 0.0
        %v994 = vmax.f32 %v986, 0.0
        %v995 = vmax.f32 %v987, 0.0
        %v996 = vmax.f32 %v988, 0.0
        %v997 = vmax.f32 %v989, 0.0
        %v998 = vmax.f32 %v990, 0.0
        %v999 = vmax.f32 %v991, 0.0
        %v1000 = vmax.f32 %v992, 0.0
        %1001 = vst [vmem:[%s404] sm:$0xff] %v993
        %1002 = vst [vmem:[%s404 + $0x8] sm:$0xff] %v994
        %1003 = vst [vmem:[%s404 + $0x10] sm:$0xff] %v995
        %1004 = vst [vmem:[%s404 + $0x18] sm:$0xff] %v996
        %1005 = vst [vmem:[%s404 + $0x20] sm:$0xff] %v997
        %1006 = vst [vmem:[%s404 + $0x28] sm:$0xff] %v998
        %1007 = vst [vmem:[%s404 + $0x30] sm:$0xff] %v999
        %1008 = vst [vmem:[%s404 + $0x38] sm:$0xff] %v1000
        %s1009 = sand.u32 %s246, 1
        %s1010 = scalar_lea.sflag [#allocation3], %s1009
        %s1011 = sand.u32 %s246, 1
        %s1012 = smul.addr %s1011, 64
        %s1013 = scalar_lea.vmem [#allocation5], %s1012
        // Predicated region
        $region61: #{graph_attention_layer.1} parent=55 // pred_check
          %p1014 = pneg %p256
        $region62: #{graph_attention_layer.1} parent=55 // pred_check_branch
          %1016 = sbr.rel (%p1014) target = $region64
        $region63: #{graph_attention_layer.1} parent=55 // pred_region
          %s1017 = smul.u32 8, %s24
          %s1019 = ssub.s32 1024, 1024
          %1020 = vsyncadd %s1010, %s1019
          %s1021 = smul.addr %s1017, 128
          %s1022 = scalar_lea.hbm %s9, %s1021
          %s1023 = sshll.u32 %s1013, 4
          %s1024 = int_to_ptr.vmem [resolvable:$true] %s1023
          %1029 = dma.vmem_to_hbm [thread:$0]  %s1024, 1024, %s1022, %s1010, 128, 128, 8
        $region64: #{graph_attention_layer.1} parent=55 // pred_fallthru
          _
      $region56: #{graph_attention_layer.1} parent=5 // pred_fallthru
        _
      %p1030 = scmp.le.s32.totalorder 2, %s19
      // Predicated region
      $region65: #{graph_attention_layer.1} parent=5 // pred_check
        %p1031 = pneg %p1030
      $region66: #{graph_attention_layer.1} parent=5 // pred_check_branch
        %1033 = sbr.rel (%p1031) target = $region68
      $region67: #{graph_attention_layer.1} parent=5 // pred_region
        %s1034 = ssub.s32 %s19, 2
        // Predicated region
        $region69: #{graph_attention_layer.1} parent=67 // pred_check
          %p1035 = pneg %p262
        $region70: #{graph_attention_layer.1} parent=67 // pred_check_branch
          %1037 = sbr.rel (%p1035) target = $region72
        $region71: #{graph_attention_layer.1} parent=67 // pred_region
          %s1038 = sand.u32 %s247, 1
          %s1039 = scalar_lea.sflag [#allocation3], %s1038
          %s1040 = sand.u32 %s247, 1
          %s1041 = smul.addr %s1040, 64
          %s1042 = scalar_lea.vmem [#allocation5], %s1041
          %1043 = dma.done %s1039, 1024
        $region72: #{graph_attention_layer.1} parent=67 // pred_fallthru
          _
      $region68: #{graph_attention_layer.1} parent=5 // pred_fallthru
        _
    $region6: #{graph_attention_layer.1} parent=1 // loop_footer
      %s23 = sadd.s32 1, %s19
    $region7: #{graph_attention_layer.1} parent=1 // loop_footer_branch
      %18 = sbr.rel target = $region3
    $region8: #{graph_attention_layer.1} parent=1 // loop_exit
      _
    %1044 = vsyncpa [#allocation3], 1
    %s1045 = scalar_lea.sflag [#allocation3], 1
    %1046 = vsyncpa %s1045, 1
    %1047 = vsyncpa [#allocation4], 1
    %s1048 = scalar_lea.sflag [#allocation4], 1
    %1049 = vsyncpa %s1048, 1

</llo_original>
